<compile_context>
chip_gen: v7x
topology: tpu7x:2x2x1
jax: 0.10.0
libtpu: 0.0.40
codegen_flags: <defaults>
</compile_context>

<pallas_src>
import functools

import jax
import jax.numpy as jnp
from jax.experimental import pallas as pl
from jax.experimental.pallas import tpu as pltpu


def _round_up(n, m):
    return ((n + m - 1) // m) * m


# ----------------------------- Pallas kernel (feature-major) -----------------

def _cond_layer_kernel(y_ref, xc_ref,
                       w1y_ref, w1x_ref, b1_ref,
                       w2_ref, b2_ref,
                       w3_ref, b3_ref,
                       yp_ref, logdet_ref,
                       *, half, flip):
    yT = y_ref[...]                                   # [seq_len, TB] f32
    if flip:
        y1 = yT[:half, :]                             # conditioning (pass-through) half
        y0 = yT[half:, :]                             # transformed half
    else:
        y0 = yT[:half, :]
        y1 = yT[half:, :]

    wd = w1y_ref.dtype                                # bf16 (or f32) weights
    # Fused s|t layer 1; the [y1 | x_cond] concat is folded into split weights.
    h = (jnp.dot(w1y_ref[...], y1.astype(wd), preferred_element_type=jnp.float32)
         + jnp.dot(w1x_ref[...], xc_ref[...].astype(wd), preferred_element_type=jnp.float32)
         + b1_ref[...])
    h = jnp.tanh(h)                                   # f32 elementwise
    h = jnp.tanh(jnp.dot(w2_ref[...], h.astype(wd),
                         preferred_element_type=jnp.float32) + b2_ref[...])
    out = jnp.dot(w3_ref[...], h.astype(wd),
                  preferred_element_type=jnp.float32) + b3_ref[...]   # [2*half, TB]

    s_out = out[:half, :]
    m_out = out[half:, :]

    # Softplus(beta=1, threshold=30); single exp, f32.
    e = jnp.exp(jnp.minimum(s_out, 30.0))
    H = jnp.where(s_out > 30.0, s_out, jnp.log1p(e))

    # Only the transformed half is stored (lane-dense, TB lanes); the pass-through
    # half already lives in the aliased output buffer (input_output_aliases={0: 0}).
    yp_ref[...] = (H * y0 + m_out).astype(yp_ref.dtype)
    logdet_ref[...] = jnp.sum(jnp.log(H), axis=0, keepdims=True).astype(logdet_ref.dtype)


# ----------------------------- Python wrappers -------------------------------

def conditional_layer_forward_t(yT, x_condT, params, flip, tile_b=2048):
    """Feature-major forward: yT [seq_len, batch], x_condT [ctx, batch].
    Returns (ypT [seq_len, batch], log_jac_det [1, batch]). yT's buffer is reused
    for ypT (donate it if calling at top level)."""
    seq_len, batch = yT.shape
    half = seq_len // 2
    ctx = x_condT.shape[0]
    w1y, w1x, b1, w2, b2, w3, b3 = params

    # Batch tile on the lane axis: either the full batch (single block) or a
    # multiple of 128 with a ragged (masked) last block.  No host-side padding.
    if batch <= tile_b:
        tb = batch
    else:
        tb = _round_up(min(tile_b, batch), 128)
    grid = (pl.cdiv(batch, tb),)

    kernel = functools.partial(_cond_layer_kernel, half=half, flip=flip)

    def col_spec(rows):                               # batch-tiled operand
        return pl.BlockSpec((rows, tb), lambda b: (0, b))

    def resident_spec(arr):                           # weights: same block every step
        return pl.BlockSpec(arr.shape, lambda b: (0, 0))

    trans_blk = 1 if flip else 0                      # half-block that receives H*y0+M

    ypT, logdet = pl.pallas_call(
        kernel,
        out_shape=(jax.ShapeDtypeStruct((seq_len, batch), jnp.float32),
                   jax.ShapeDtypeStruct((1, batch), jnp.float32)),
        grid_spec=pltpu.PrefetchScalarGridSpec(
            num_scalar_prefetch=0,
            grid=grid,
            in_specs=[col_spec(seq_len), col_spec(ctx),
                      resident_spec(w1y), resident_spec(w1x), resident_spec(b1),
                      resident_spec(w2), resident_spec(b2),
                      resident_spec(w3), resident_spec(b3)],
            out_specs=(pl.BlockSpec((half, tb), lambda b: (trans_blk, b)),
                       pl.BlockSpec((1, tb), lambda b: (0, b))),
        ),
        input_output_aliases={0: 0},                  # yT buffer becomes ypT in place
        compiler_params=pltpu.CompilerParams(
            dimension_semantics=("parallel",),        # 2 TCs split the batch on v7x
            vmem_limit_bytes=32 * 1024 * 1024,
        ),
    )(yT, x_condT, w1y, w1x, b1, w2, b2, w3, b3)
    return ypT, logdet


@functools.partial(jax.jit, static_argnames=("flip", "tile_b"))
def conditional_layer_forward(y, x_cond, params, flip, tile_b=2048):
    """Batch-major convenience wrapper mirroring ConditionalLayer.forward.
    y [batch, seq_len], x_cond [batch, ctx] -> (yp [batch, seq_len], log_jac_det [batch]).
    The layout transposes are paid once at this boundary; a flow stack should keep
    everything feature-major and chain conditional_layer_forward_t directly."""
    ypT, logdet = conditional_layer_forward_t(y.T, x_cond.T, params, flip, tile_b)
    return ypT.T, logdet[0]


# --------------------- deterministic parameter construction -----------------

def make_unfused_params(key, seq_len, hidden_dim, context_dim):
    """PyTorch-equivalent SNet params (f32; weights stored as [in, out])."""
    half = seq_len // 2
    in_len = half + context_dim

    def init_linear(k, in_l, out_l):
        kw, kb = jax.random.split(k)
        bound = 1.0 / (in_l ** 0.5)
        w = jax.random.uniform(kw, (in_l, out_l), jnp.float32, -bound, bound)
        b = jax.random.uniform(kb, (1, out_l), jnp.float32, -bound, bound)
        return w, b

    keys = jax.random.split(key, 6)
    s_w1, s_b1 = init_linear(keys[0], in_len, hidden_dim)
    s_w2, s_b2 = init_linear(keys[1], hidden_dim, hidden_dim)
    s_w3, s_b3 = init_linear(keys[2], hidden_dim, half)
    t_w1, t_b1 = init_linear(keys[3], in_len, hidden_dim)
    t_w2, t_b2 = init_linear(keys[4], hidden_dim, hidden_dim)
    t_w3, t_b3 = init_linear(keys[5], hidden_dim, half)
    return (s_w1, s_b1, s_w2, s_b2, s_w3, s_b3,
            t_w1, t_b1, t_w2, t_b2, t_w3, t_b3)


def make_fused_params(unfused, half, hidden, weight_dtype=jnp.bfloat16):
    """Fuse s-net/t-net into one MLP, transpose to feature-major ([out, in]) layout,
    and split layer-1 weights for the folded [y1 | x_cond] concat."""
    (s_w1, s_b1, s_w2, s_b2, s_w3, s_b3,
     t_w1, t_b1, t_w2, t_b2, t_w3, t_b3) = unfused

    w1 = jnp.concatenate([s_w1, t_w1], axis=1)                       # [half+ctx, 2H]
    b1 = jnp.concatenate([s_b1, t_b1], axis=1)                       # [1, 2H]

    zhh = jnp.zeros((hidden, hidden), jnp.float32)
    w2 = jnp.concatenate([jnp.concatenate([s_w2, zhh], axis=1),
                          jnp.concatenate([zhh, t_w2], axis=1)], axis=0)   # [2H, 2H]
    b2 = jnp.concatenate([s_b2, t_b2], axis=1)

    zho = jnp.zeros((hidden, half), jnp.float32)
    w3 = jnp.concatenate([jnp.concatenate([s_w3, zho], axis=1),
                          jnp.concatenate([zho, t_w3], axis=1)], axis=0)   # [2H, 2*half]
    b3 = jnp.concatenate([s_b3, t_b3], axis=1)                       # output = [s_out | t_out]

    w1T = w1.T                                                       # [2H, half+ctx]
    return (w1T[:, :half].astype(weight_dtype),    # w1yT [2H, half]
            w1T[:, half:].astype(weight_dtype),    # w1xT [2H, ctx]
            b1.T,                                  # [2H, 1]  f32
            w2.T.astype(weight_dtype),             # [2H, 2H]
            b2.T,                                  # [2H, 1]  f32
            w3.T.astype(weight_dtype),             # [2*half, 2H]
            b3.T)                                  # [2*half, 1] f32


# ------------------------------ pure-JAX reference ---------------------------

def reference_forward(y, x_cond, flip, unfused, *, weight_dtype=jnp.float32):
    """Direct port of ConditionalLayer.forward (separate s/t nets).
    weight_dtype=bfloat16 mirrors the kernel's mixed-precision policy."""
    (s_w1, s_b1, s_w2, s_b2, s_w3, s_b3,
     t_w1, t_b1, t_w2, t_b2, t_w3, t_b3) = unfused
    seq_len = y.shape[1]
    half = seq_len // 2

    def mm(a, w):
        return jnp.dot(a.astype(weight_dtype), w.astype(weight_dtype),
                       preferred_element_type=jnp.float32)

    def snet(x, w1, b1, w2, b2, w3, b3):
        h = jnp.tanh(mm(x, w1) + b1)
        h = jnp.tanh(mm(h, w2) + b2)
        return mm(h, w3) + b3

    y0, y1 = y[:, :half], y[:, half:]
    if flip:
        y0, y1 = y1, y0
    y1x = jnp.concatenate([y1, x_cond], axis=1)
    s_out = snet(y1x, s_w1, s_b1, s_w2, s_b2, s_w3, s_b3)
    m_out = snet(y1x, t_w1, t_b1, t_w2, t_b2, t_w3, t_b3)
    e = jnp.exp(jnp.minimum(s_out, 30.0))
    H = jnp.where(s_out > 30.0, s_out, jnp.log1p(e))
    yp0 = H * y0 + m_out
    yp1 = y1
    if flip:
        yp1, yp0 = yp0, yp1
    yp = jnp.concatenate([yp0, yp1], axis=-1)
    return yp, jnp.sum(jnp.log(H), axis=-1)


# ----------------------------------- main ------------------------------------

if __name__ == "__main__":
    seq_len, hidden_dim, context_dim = 16, 32, 4

    key = jax.random.PRNGKey(0)
    k_p, k_data = jax.random.split(key)
    unfused = make_unfused_params(k_p, seq_len, hidden_dim, context_dim)
    params = make_fused_params(unfused, seq_len // 2, hidden_dim,
                               weight_dtype=jnp.bfloat16)

    ok = True
    # (batch, tile_b): tiny single-block case, full-batch single block, and a
    # multi-step grid with a ragged last block (no host-side padding anywhere).
    for batch, tile_b in ((2, 2048), (200, 2048), (523, 128)):
        ky, kc = jax.random.split(jax.random.fold_in(k_data, batch))
        y = jax.random.normal(ky, (batch, seq_len), jnp.float32)
        x_cond = jax.random.normal(kc, (batch, context_dim), jnp.float32)
        for flip in (False, True):
            yp, logdet = conditional_layer_forward(y, x_cond, params,
                                                   flip=flip, tile_b=tile_b)
            yp, logdet = jax.block_until_ready((yp, logdet))

            # precision-matched reference (bf16 matmul operands, f32 accum/elementwise)
            yp_m, ld_m = reference_forward(y, x_cond, flip, unfused,
                                           weight_dtype=jnp.bfloat16)
            # full-f32 spec reference (direct port of the PyTorch module)
            yp_f, ld_f = reference_forward(y, x_cond, flip, unfused,
                                           weight_dtype=jnp.float32)

            ok &= bool(jnp.allclose(yp, yp_m, atol=1e-2, rtol=1e-2))
            ok &= bool(jnp.allclose(logdet, ld_m, atol=1e-2, rtol=1e-2))
            ok &= bool(jnp.allclose(yp, yp_f, atol=1.5e-1, rtol=1.5e-1))
            ok &= bool(jnp.allclose(logdet, ld_f, atol=1.5e-1, rtol=1.5e-1))

    print("KERNEL_OK" if ok else "KERNEL_MISMATCH")
</pallas_src>

<mosaic_0001>
module attributes {stable_mosaic.version = 11 : i64} {
  func.func @_cond_layer_kernel(%arg0: i32, %arg1: memref<16x2xf32, #tpu.memory_space<vmem>>, %arg2: memref<4x2xf32, #tpu.memory_space<vmem>>, %arg3: memref<64x8xbf16, #tpu.memory_space<vmem>>, %arg4: memref<64x4xbf16, #tpu.memory_space<vmem>>, %arg5: memref<64x1xf32, #tpu.memory_space<vmem>>, %arg6: memref<64x64xbf16, #tpu.memory_space<vmem>>, %arg7: memref<64x1xf32, #tpu.memory_space<vmem>>, %arg8: memref<16x64xbf16, #tpu.memory_space<vmem>>, %arg9: memref<16x1xf32, #tpu.memory_space<vmem>>, %arg10: memref<8x2xf32, #tpu.memory_space<vmem>>, %arg11: memref<1x2xf32, #tpu.memory_space<vmem>>) attributes {dimension_semantics = [#tpu.dimension_semantics<parallel>], iteration_bounds = array<i64: 1>, scalar_prefetch = 0 : i64, scratch_operands = 0 : i64, tpu.core_type = #tpu.core_type<tc>, window_params = [{transform_indices = @transform_0, window_bounds = array<i64: 16, 2>}, {transform_indices = @transform_1, window_bounds = array<i64: 4, 2>}, {pipeline_mode = #tpu.pipeline_mode<synchronous>, transform_indices = @transform_2, window_bounds = array<i64: 64, 8>}, {pipeline_mode = #tpu.pipeline_mode<synchronous>, transform_indices = @transform_3, window_bounds = array<i64: 64, 4>}, {pipeline_mode = #tpu.pipeline_mode<synchronous>, transform_indices = @transform_4, window_bounds = array<i64: 64, 1>}, {pipeline_mode = #tpu.pipeline_mode<synchronous>, transform_indices = @transform_5, window_bounds = array<i64: 64, 64>}, {pipeline_mode = #tpu.pipeline_mode<synchronous>, transform_indices = @transform_6, window_bounds = array<i64: 64, 1>}, {pipeline_mode = #tpu.pipeline_mode<synchronous>, transform_indices = @transform_7, window_bounds = array<i64: 16, 64>}, {pipeline_mode = #tpu.pipeline_mode<synchronous>, transform_indices = @transform_8, window_bounds = array<i64: 16, 1>}, {transform_indices = @transform_9, window_bounds = array<i64: 8, 2>}, {transform_indices = @transform_10, window_bounds = array<i64: 1, 2>}]} {
    %c0 = arith.constant 0 : index
    %c0_0 = arith.constant 0 : index
    %0 = vector.load %arg1[%c0, %c0_0] : memref<16x2xf32, #tpu.memory_space<vmem>>, vector<16x2xf32>
    %1 = vector.extract_strided_slice %0 {offsets = [0, 0], sizes = [8, 2], strides = [1, 1]} : vector<16x2xf32> to vector<8x2xf32>
    %2 = vector.extract_strided_slice %0 {offsets = [8, 0], sizes = [8, 2], strides = [1, 1]} : vector<16x2xf32> to vector<8x2xf32>
    %c0_1 = arith.constant 0 : index
    %c0_2 = arith.constant 0 : index
    %3 = vector.load %arg3[%c0_1, %c0_2] : memref<64x8xbf16, #tpu.memory_space<vmem>>, vector<64x8xbf16>
    %4 = arith.truncf %2 : vector<8x2xf32> to vector<8x2xbf16>
    %cst = arith.constant dense<0.000000e+00> : vector<64x2xf32>
    %5 = tpu.matmul %3, %4, %cst {dimension_numbers = #tpu.dot_dimension_numbers<[1], [0], [0], [1], [0, 0, 1, 1], [], []>} : vector<64x8xbf16>, vector<8x2xbf16>, vector<64x2xf32> -> vector<64x2xf32>
    %c0_3 = arith.constant 0 : index
    %c0_4 = arith.constant 0 : index
    %6 = vector.load %arg4[%c0_3, %c0_4] : memref<64x4xbf16, #tpu.memory_space<vmem>>, vector<64x4xbf16>
    %c0_5 = arith.constant 0 : index
    %c0_6 = arith.constant 0 : index
    %7 = vector.load %arg2[%c0_5, %c0_6] : memref<4x2xf32, #tpu.memory_space<vmem>>, vector<4x2xf32>
    %8 = arith.truncf %7 : vector<4x2xf32> to vector<4x2xbf16>
    %cst_7 = arith.constant dense<0.000000e+00> : vector<64x2xf32>
    %9 = tpu.matmul %6, %8, %cst_7 {dimension_numbers = #tpu.dot_dimension_numbers<[1], [0], [0], [1], [0, 0, 1, 1], [], []>} : vector<64x4xbf16>, vector<4x2xbf16>, vector<64x2xf32> -> vector<64x2xf32>
    %10 = arith.addf %5, %9 : vector<64x2xf32>
    %c0_8 = arith.constant 0 : index
    %c0_9 = arith.constant 0 : index
    %11 = vector.load %arg5[%c0_8, %c0_9] : memref<64x1xf32, #tpu.memory_space<vmem>>, vector<64x1xf32>
    %12 = vector.broadcast %11 : vector<64x1xf32> to vector<64x2xf32>
    %13 = arith.addf %10, %12 : vector<64x2xf32>
    %14 = math.tanh %13 : vector<64x2xf32>
    %c0_10 = arith.constant 0 : index
    %c0_11 = arith.constant 0 : index
    %15 = vector.load %arg6[%c0_10, %c0_11] : memref<64x64xbf16, #tpu.memory_space<vmem>>, vector<64x64xbf16>
    %16 = arith.truncf %14 : vector<64x2xf32> to vector<64x2xbf16>
    %cst_12 = arith.constant dense<0.000000e+00> : vector<64x2xf32>
    %17 = tpu.matmul %15, %16, %cst_12 {dimension_numbers = #tpu.dot_dimension_numbers<[1], [0], [0], [1], [0, 0, 1, 1], [], []>} : vector<64x64xbf16>, vector<64x2xbf16>, vector<64x2xf32> -> vector<64x2xf32>
    %c0_13 = arith.constant 0 : index
    %c0_14 = arith.constant 0 : index
    %18 = vector.load %arg7[%c0_13, %c0_14] : memref<64x1xf32, #tpu.memory_space<vmem>>, vector<64x1xf32>
    %19 = vector.broadcast %18 : vector<64x1xf32> to vector<64x2xf32>
    %20 = arith.addf %17, %19 : vector<64x2xf32>
    %21 = math.tanh %20 : vector<64x2xf32>
    %c0_15 = arith.constant 0 : index
    %c0_16 = arith.constant 0 : index
    %22 = vector.load %arg8[%c0_15, %c0_16] : memref<16x64xbf16, #tpu.memory_space<vmem>>, vector<16x64xbf16>
    %23 = arith.truncf %21 : vector<64x2xf32> to vector<64x2xbf16>
    %cst_17 = arith.constant dense<0.000000e+00> : vector<16x2xf32>
    %24 = tpu.matmul %22, %23, %cst_17 {dimension_numbers = #tpu.dot_dimension_numbers<[1], [0], [0], [1], [0, 0, 1, 1], [], []>} : vector<16x64xbf16>, vector<64x2xbf16>, vector<16x2xf32> -> vector<16x2xf32>
    %c0_18 = arith.constant 0 : index
    %c0_19 = arith.constant 0 : index
    %25 = vector.load %arg9[%c0_18, %c0_19] : memref<16x1xf32, #tpu.memory_space<vmem>>, vector<16x1xf32>
    %26 = vector.broadcast %25 : vector<16x1xf32> to vector<16x2xf32>
    %27 = arith.addf %24, %26 : vector<16x2xf32>
    %28 = vector.extract_strided_slice %27 {offsets = [0, 0], sizes = [8, 2], strides = [1, 1]} : vector<16x2xf32> to vector<8x2xf32>
    %29 = vector.extract_strided_slice %27 {offsets = [8, 0], sizes = [8, 2], strides = [1, 1]} : vector<16x2xf32> to vector<8x2xf32>
    %cst_20 = arith.constant 3.000000e+01 : f32
    %30 = vector.broadcast %cst_20 : f32 to vector<8x2xf32>
    %31 = arith.minimumf %28, %30 : vector<8x2xf32>
    %32 = math.exp %31 : vector<8x2xf32>
    %cst_21 = arith.constant 3.000000e+01 : f32
    %33 = vector.broadcast %cst_21 : f32 to vector<8x2xf32>
    %34 = arith.cmpf ogt, %28, %33 : vector<8x2xf32>
    %35 = math.log1p %32 : vector<8x2xf32>
    %36 = arith.select %34, %28, %35 : vector<8x2xi1>, vector<8x2xf32>
    %37 = arith.mulf %36, %1 : vector<8x2xf32>
    %38 = arith.addf %37, %29 : vector<8x2xf32>
    %c0_22 = arith.constant 0 : index
    %c0_23 = arith.constant 0 : index
    %39 = vector.load %arg10[%c0_22, %c0_23] : memref<8x2xf32, #tpu.memory_space<vmem>>, vector<8x2xf32>
    tpu.vector_store %arg10[%c0_22, %c0_23], %38 {strides = array<i32>} : memref<8x2xf32, #tpu.memory_space<vmem>>, vector<8x2xf32>,
    %40 = math.log %36 : vector<8x2xf32>
    %cst_24 = arith.constant dense<0.000000e+00> : vector<2xf32>
    %41 = vector.multi_reduction <add>, %40, %cst_24 [0] : vector<8x2xf32> to vector<2xf32>
    %42 = vector.shape_cast %41 : vector<2xf32> to vector<1x2xf32>
    %c0_25 = arith.constant 0 : index
    %c0_26 = arith.constant 0 : index
    %43 = vector.load %arg11[%c0_25, %c0_26] : memref<1x2xf32, #tpu.memory_space<vmem>>, vector<1x2xf32>
    tpu.vector_store %arg11[%c0_25, %c0_26], %42 {strides = array<i32>} : memref<1x2xf32, #tpu.memory_space<vmem>>, vector<1x2xf32>,
    return
  }
  func.func @transform_0(%arg0: i32) -> (i32, i32) {
    %c0_i32 = arith.constant 0 : i32
    %c0_i32_0 = arith.constant 0 : i32
    return %c0_i32, %arg0 : i32, i32
  }
  func.func @transform_1(%arg0: i32) -> (i32, i32) {
    %c0_i32 = arith.constant 0 : i32
    %c0_i32_0 = arith.constant 0 : i32
    return %c0_i32, %arg0 : i32, i32
  }
  func.func @transform_2(%arg0: i32) -> (i32, i32) {
    %c0_i32 = arith.constant 0 : i32
    %c0_i32_0 = arith.constant 0 : i32
    %c0_i32_1 = arith.constant 0 : i32
    return %c0_i32, %c0_i32_0 : i32, i32
  }
  func.func @transform_3(%arg0: i32) -> (i32, i32) {
    %c0_i32 = arith.constant 0 : i32
    %c0_i32_0 = arith.constant 0 : i32
    %c0_i32_1 = arith.constant 0 : i32
    return %c0_i32, %c0_i32_0 : i32, i32
  }
  func.func @transform_4(%arg0: i32) -> (i32, i32) {
    %c0_i32 = arith.constant 0 : i32
    %c0_i32_0 = arith.constant 0 : i32
    %c0_i32_1 = arith.constant 0 : i32
    return %c0_i32, %c0_i32_0 : i32, i32
  }
  func.func @transform_5(%arg0: i32) -> (i32, i32) {
    %c0_i32 = arith.constant 0 : i32
    %c0_i32_0 = arith.constant 0 : i32
    %c0_i32_1 = arith.constant 0 : i32
    return %c0_i32, %c0_i32_0 : i32, i32
  }
  func.func @transform_6(%arg0: i32) -> (i32, i32) {
    %c0_i32 = arith.constant 0 : i32
    %c0_i32_0 = arith.constant 0 : i32
    %c0_i32_1 = arith.constant 0 : i32
    return %c0_i32, %c0_i32_0 : i32, i32
  }
  func.func @transform_7(%arg0: i32) -> (i32, i32) {
    %c0_i32 = arith.constant 0 : i32
    %c0_i32_0 = arith.constant 0 : i32
    %c0_i32_1 = arith.constant 0 : i32
    return %c0_i32, %c0_i32_0 : i32, i32
  }
  func.func @transform_8(%arg0: i32) -> (i32, i32) {
    %c0_i32 = arith.constant 0 : i32
    %c0_i32_0 = arith.constant 0 : i32
    %c0_i32_1 = arith.constant 0 : i32
    return %c0_i32, %c0_i32_0 : i32, i32
  }
  func.func @transform_9(%arg0: i32) -> (i32, i32) {
    %c0_i32 = arith.constant 0 : i32
    %c0_i32_0 = arith.constant 0 : i32
    return %c0_i32, %arg0 : i32, i32
  }
  func.func @transform_10(%arg0: i32) -> (i32, i32) {
    %c0_i32 = arith.constant 0 : i32
    %c0_i32_0 = arith.constant 0 : i32
    return %c0_i32, %arg0 : i32, i32
  }
}

</mosaic_0001>

<llo_original>
// kernel: conditional_layer_forward.1
$region0: #{conditional_layer_forward.1}
  #allocation0 [shape = 'u32[]', space=smem, size = 0x4, offset = 0x4, fixed_abs, tag = 'smem constant byte address 0x4 - core index']
  #allocation1 [shape = 'u32[144,128]{1,0:T(1,128)}', space=vmem, size = 0x12000, scoped, tag = 'internal scratch']
  %s0 = inlined_call_operand.vmem [shape: f32[16,2], index: 0, kind: input, shape index: {}, may-alias: {0,9}]
  %s1 = inlined_call_operand.vmem [shape: f32[4,2], index: 1, kind: input, shape index: {}]
  %s2 = inlined_call_operand.vmem [shape: bf16[64,8], index: 2, kind: input, shape index: {}]
  %s3 = inlined_call_operand.vmem [shape: bf16[64,4], index: 3, kind: input, shape index: {}]
  %s4 = inlined_call_operand.vmem [shape: f32[64,1], index: 4, kind: input, shape index: {}]
  %s5 = inlined_call_operand.vmem [shape: bf16[64,64], index: 5, kind: input, shape index: {}]
  %s6 = inlined_call_operand.vmem [shape: f32[64,1], index: 6, kind: input, shape index: {}]
  %s7 = inlined_call_operand.vmem [shape: bf16[16,64], index: 7, kind: input, shape index: {}]
  %s8 = inlined_call_operand.vmem [shape: f32[16,1], index: 8, kind: input, shape index: {}]
  %s9 = inlined_call_operand.vmem [shape: f32[16,2], index: 9, kind: output, shape index: {0}, may-alias: {0,9}]
  %s10 = inlined_call_operand.hbm [shape: f32[1,2], index: 10, kind: output, shape index: {1}]
  %11 = xla_tuple %s9, %s10
  %s12 = sld [smem:[#allocation0]]
  $region54: #{conditional_layer_forward.1} parent=0
    _
  %s14 = ssub.s32 1, %s12
  %s15 = scalar_select 0, %s14, %s12
  $region1: #{conditional_layer_forward.1} parent=0
    #allocation2 [shape = 'u8[512]{0}', space=vmem, size = 0x400, scoped, tag = 'output window, operand 1, single buffered']
    #allocation3 [shape = 's32[1]{0}', space=sflag, size = 0x4, scoped, tag = 'scoped memory for conditional_layer_forward.1']
    %16 = vsyncpa [#allocation3], 0
    // Predicated region
    $region2: #{conditional_layer_forward.1} parent=1 // pred_check
      _
    $region3: #{conditional_layer_forward.1} parent=1 // pred_check_branch
      %18 = sbr.rel (0) target = $region5
    $region4: #{conditional_layer_forward.1} parent=1 // pred_region
      _
    $region5: #{conditional_layer_forward.1} parent=1 // pred_fallthru
      _
    // Predicated region
    $region6: #{conditional_layer_forward.1} parent=1 // pred_check
      _
    $region7: #{conditional_layer_forward.1} parent=1 // pred_check_branch
      %20 = sbr.rel (0) target = $region9
    $region8: #{conditional_layer_forward.1} parent=1 // pred_region
      _
    $region9: #{conditional_layer_forward.1} parent=1 // pred_fallthru
      _
    // Predicated region
    $region10: #{conditional_layer_forward.1} parent=1 // pred_check
      _
    $region11: #{conditional_layer_forward.1} parent=1 // pred_check_branch
      %22 = sbr.rel (0) target = $region13
    $region12: #{conditional_layer_forward.1} parent=1 // pred_region
      _
    $region13: #{conditional_layer_forward.1} parent=1 // pred_fallthru
      _
    // Predicated region
    $region14: #{conditional_layer_forward.1} parent=1 // pred_check
      _
    $region15: #{conditional_layer_forward.1} parent=1 // pred_check_branch
      %24 = sbr.rel (0) target = $region17
    $region16: #{conditional_layer_forward.1} parent=1 // pred_region
      _
    $region17: #{conditional_layer_forward.1} parent=1 // pred_fallthru
      _
    // Predicated region
    $region18: #{conditional_layer_forward.1} parent=1 // pred_check
      _
    $region19: #{conditional_layer_forward.1} parent=1 // pred_check_branch
      %26 = sbr.rel (0) target = $region21
    $region20: #{conditional_layer_forward.1} parent=1 // pred_region
      _
    $region21: #{conditional_layer_forward.1} parent=1 // pred_fallthru
      _
    // Predicated region
    $region22: #{conditional_layer_forward.1} parent=1 // pred_check
      _
    $region23: #{conditional_layer_forward.1} parent=1 // pred_check_branch
      %28 = sbr.rel (0) target = $region25
    $region24: #{conditional_layer_forward.1} parent=1 // pred_region
      _
    $region25: #{conditional_layer_forward.1} parent=1 // pred_fallthru
      _
    // Predicated region
    $region26: #{conditional_layer_forward.1} parent=1 // pred_check
      _
    $region27: #{conditional_layer_forward.1} parent=1 // pred_check_branch
      %30 = sbr.rel (0) target = $region29
    $region28: #{conditional_layer_forward.1} parent=1 // pred_region
      _
    $region29: #{conditional_layer_forward.1} parent=1 // pred_fallthru
      _
    // Predicated region
    $region30: #{conditional_layer_forward.1} parent=1 // pred_check
      _
    $region31: #{conditional_layer_forward.1} parent=1 // pred_check_branch
      %32 = sbr.rel (0) target = $region33
    $region32: #{conditional_layer_forward.1} parent=1 // pred_region
      _
    $region33: #{conditional_layer_forward.1} parent=1 // pred_fallthru
      _
    // Predicated region
    $region34: #{conditional_layer_forward.1} parent=1 // pred_check
      _
    $region35: #{conditional_layer_forward.1} parent=1 // pred_check_branch
      %34 = sbr.rel (0) target = $region37
    $region36: #{conditional_layer_forward.1} parent=1 // pred_region
      _
    $region37: #{conditional_layer_forward.1} parent=1 // pred_fallthru
      _
    %v36 = vld [vmem:[%s0] sm:$0xff]
    %v37 = vld [vmem:[%s0 + $0x8] sm:$0xff]
    %v38 = vld [vmem:[%s2] sm:$0xf]
    %v39 = vld [vmem:[%s2 + $0x4] sm:$0xf]
    %v40 = vld [vmem:[%s2 + $0x8] sm:$0xf]
    %v41 = vld [vmem:[%s2 + $0xc] sm:$0xf]
    %v42 = vld [vmem:[%s2 + $0x10] sm:$0xf]
    %v43 = vld [vmem:[%s2 + $0x14] sm:$0xf]
    %v44 = vld [vmem:[%s2 + $0x18] sm:$0xf]
    %v45 = vld [vmem:[%s2 + $0x1c] sm:$0xf]
    %v46 = vpack.c.bf16 %v37, %v37
    %v47 = vld [vmem:[%s3] sm:$0xf]
    %v48 = vld [vmem:[%s3 + $0x4] sm:$0xf]
    %v49 = vld [vmem:[%s3 + $0x8] sm:$0xf]
    %v50 = vld [vmem:[%s3 + $0xc] sm:$0xf]
    %v51 = vld [vmem:[%s3 + $0x10] sm:$0xf]
    %v52 = vld [vmem:[%s3 + $0x14] sm:$0xf]
    %v53 = vld [vmem:[%s3 + $0x18] sm:$0xf]
    %v54 = vld [vmem:[%s3 + $0x1c] sm:$0xf]
    %v55 = vld [vmem:[%s1] sm:$0xf]
    %v56 = vpack.c.bf16 %v55, %v55
    %v65 = vunpack.c.l.b16 %v47
    %v66 = vunpack.c.l.b16 %v48
    %v67 = vunpack.c.l.b16 %v49
    %v68 = vunpack.c.l.b16 %v50
    %v69 = vunpack.c.l.b16 %v51
    %v70 = vunpack.c.l.b16 %v52
    %v71 = vunpack.c.l.b16 %v53
    %v72 = vunpack.c.l.b16 %v54
    %v73 = vpack.c.b16 %v66, %v65
    %v74 = vpack.c.b16 %v68, %v67
    %v75 = vpack.c.b16 %v70, %v69
    %v76 = vpack.c.b16 %v72, %v71
    %vm77 = vcmask 31744
    %v79 = vsel %vm77, %v73, 0
    %v82 = vsel %vm77, %v74, 0
    %v85 = vsel %vm77, %v75, 0
    %v88 = vsel %vm77, %v76, 0
    %vm90 = vcmask 1041408
    %v92 = vsel %vm90, %v56, 0
    %94 = vmatprep.subr.bf16.mxu0 0
    %95 = vmatpush1.bf16.msra.mxu0 %v92
    %96 = vmatprep.subr.bf16.mxu0 0
    %97 = vmatpush1.bf16.msra.mxu0 0
    %98 = vmatprep.subr.bf16.mxu0 0
    %99 = vmatpush1.bf16.msra.mxu0 0
    %100 = vmatprep.subr.bf16.mxu0 0
    %101 = vmatpush1.bf16.msra.mxu0 0
    %102 = vmatprep.subr.bf16.mxu0 0
    %103 = vmatpush1.bf16.msra.mxu0 0
    %104 = vmatprep.subr.bf16.mxu0 0
    %105 = vmatpush1.bf16.msra.mxu0 0
    %106 = vmatprep.subr.bf16.mxu0 0
    %107 = vmatpush1.bf16.msra.mxu0 0
    %108 = vmatprep.subr.bf16.mxu0 0
    %109 = vmatpush1.bf16.msra.mxu0 0
    %110 = vmatprep.subr.bf16.mxu0 0
    %111 = vmatpush1.bf16.msra.mxu0 0
    %112 = vmatprep.subr.bf16.mxu0 0
    %113 = vmatpush1.bf16.msra.mxu0 0
    %114 = vmatprep.subr.bf16.mxu0 0
    %115 = vmatpush1.bf16.msra.mxu0 0
    %116 = vmatprep.subr.bf16.mxu0 0
    %117 = vmatpush1.bf16.msra.mxu0 0
    %118 = vmatprep.subr.bf16.mxu0 0
    %119 = vmatpush1.bf16.msra.mxu0 0
    %120 = vmatprep.subr.bf16.mxu0 0
    %121 = vmatpush1.bf16.msra.mxu0 0
    %122 = vmatprep.subr.bf16.mxu0 0
    %123 = vmatpush1.bf16.msra.mxu0 0
    %124 = vmatprep.subr.bf16.mxu0 0
    %125 = vmatpush1.bf16.msra.mxu0 0
    %126 = vmatprep.mubr.bf16.mxu0 0
    %127 = vmatmul.mubr.bf16.gmra.mrb[0].mxu0 %v79
    %v128 = vpop.f32.mrb[0].mxu0
    %v129 = vadd.f32 0.0, %v128
    %v130 = vpop.f32.mrb[0].mxu0
    %v131 = vpop.f32.mrb[0].mxu0
    %v132 = vadd.f32 0.0, %v131
    %v133 = vpop.f32.mrb[0].mxu0
    %134 = vmatprep.mubr.bf16.mxu0 0
    %135 = vmatmul.mubr.bf16.gmra.mrb[0].mxu0 %v82
    %v136 = vpop.f32.mrb[0].mxu0
    %v137 = vadd.f32 0.0, %v136
    %v138 = vpop.f32.mrb[0].mxu0
    %v139 = vpop.f32.mrb[0].mxu0
    %v140 = vadd.f32 0.0, %v139
    %v141 = vpop.f32.mrb[0].mxu0
    %142 = vmatprep.mubr.bf16.mxu0 0
    %143 = vmatmul.mubr.bf16.gmra.mrb[0].mxu0 %v85
    %v144 = vpop.f32.mrb[0].mxu0
    %v145 = vadd.f32 0.0, %v144
    %v146 = vpop.f32.mrb[0].mxu0
    %v147 = vpop.f32.mrb[0].mxu0
    %v148 = vadd.f32 0.0, %v147
    %v149 = vpop.f32.mrb[0].mxu0
    %150 = vmatprep.mubr.bf16.mxu0 0
    %151 = vmatmul.mubr.bf16.gmra.mrb[0].mxu0 %v88
    %v152 = vpop.f32.mrb[0].mxu0
    %v153 = vadd.f32 0.0, %v152
    %v154 = vpop.f32.mrb[0].mxu0
    %v155 = vpop.f32.mrb[0].mxu0
    %v156 = vadd.f32 0.0, %v155
    %v157 = vpop.f32.mrb[0].mxu0
    %158 = vdwg.mxu0
    %v167 = vunpack.c.l.b16 %v38
    %v168 = vunpack.c.l.b16 %v39
    %v169 = vunpack.c.l.b16 %v40
    %v170 = vunpack.c.l.b16 %v41
    %v171 = vunpack.c.l.b16 %v42
    %v172 = vunpack.c.l.b16 %v43
    %v173 = vunpack.c.l.b16 %v44
    %v174 = vunpack.c.l.b16 %v45
    %v175 = vpack.c.b16 %v168, %v167
    %v176 = vpack.c.b16 %v170, %v169
    %v177 = vpack.c.b16 %v172, %v171
    %v178 = vpack.c.b16 %v174, %v173
    %vm179 = vcmask 64512
    %v181 = vsel %vm179, %v175, 0
    %v184 = vsel %vm179, %v176, 0
    %v187 = vsel %vm179, %v177, 0
    %v190 = vsel %vm179, %v178, 0
    %vm192 = vcmask 1043456
    %v194 = vsel %vm192, %v46, 0
    %196 = vmatprep.subr.bf16.mxu0 0
    %197 = vmatpush1.bf16.msra.mxu0 %v194
    %198 = vmatprep.subr.bf16.mxu0 0
    %199 = vmatpush1.bf16.msra.mxu0 0
    %200 = vmatprep.subr.bf16.mxu0 0
    %201 = vmatpush1.bf16.msra.mxu0 0
    %202 = vmatprep.subr.bf16.mxu0 0
    %203 = vmatpush1.bf16.msra.mxu0 0
    %204 = vmatprep.subr.bf16.mxu0 0
    %205 = vmatpush1.bf16.msra.mxu0 0
    %206 = vmatprep.subr.bf16.mxu0 0
    %207 = vmatpush1.bf16.msra.mxu0 0
    %208 = vmatprep.subr.bf16.mxu0 0
    %209 = vmatpush1.bf16.msra.mxu0 0
    %210 = vmatprep.subr.bf16.mxu0 0
    %211 = vmatpush1.bf16.msra.mxu0 0
    %212 = vmatprep.subr.bf16.mxu0 0
    %213 = vmatpush1.bf16.msra.mxu0 0
    %214 = vmatprep.subr.bf16.mxu0 0
    %215 = vmatpush1.bf16.msra.mxu0 0
    %216 = vmatprep.subr.bf16.mxu0 0
    %217 = vmatpush1.bf16.msra.mxu0 0
    %218 = vmatprep.subr.bf16.mxu0 0
    %219 = vmatpush1.bf16.msra.mxu0 0
    %220 = vmatprep.subr.bf16.mxu0 0
    %221 = vmatpush1.bf16.msra.mxu0 0
    %222 = vmatprep.subr.bf16.mxu0 0
    %223 = vmatpush1.bf16.msra.mxu0 0
    %224 = vmatprep.subr.bf16.mxu0 0
    %225 = vmatpush1.bf16.msra.mxu0 0
    %226 = vmatprep.subr.bf16.mxu0 0
    %227 = vmatpush1.bf16.msra.mxu0 0
    %228 = vmatprep.mubr.bf16.mxu0 0
    %229 = vmatmul.mubr.bf16.gmra.mrb[0].mxu0 %v181
    %v230 = vpop.f32.mrb[0].mxu0
    %v231 = vadd.f32 %v129, %v230
    %v232 = vpop.f32.mrb[0].mxu0
    %v233 = vpop.f32.mrb[0].mxu0
    %v234 = vadd.f32 %v132, %v233
    %v235 = vpop.f32.mrb[0].mxu0
    %236 = vmatprep.mubr.bf16.mxu0 0
    %237 = vmatmul.mubr.bf16.gmra.mrb[0].mxu0 %v184
    %v238 = vpop.f32.mrb[0].mxu0
    %v239 = vadd.f32 %v137, %v238
    %v240 = vpop.f32.mrb[0].mxu0
    %v241 = vpop.f32.mrb[0].mxu0
    %v242 = vadd.f32 %v140, %v241
    %v243 = vpop.f32.mrb[0].mxu0
    %244 = vmatprep.mubr.bf16.mxu0 0
    %245 = vmatmul.mubr.bf16.gmra.mrb[0].mxu0 %v187
    %v246 = vpop.f32.mrb[0].mxu0
    %v247 = vadd.f32 %v145, %v246
    %v248 = vpop.f32.mrb[0].mxu0
    %v249 = vpop.f32.mrb[0].mxu0
    %v250 = vadd.f32 %v148, %v249
    %v251 = vpop.f32.mrb[0].mxu0
    %252 = vmatprep.mubr.bf16.mxu0 0
    %253 = vmatmul.mubr.bf16.gmra.mrb[0].mxu0 %v190
    %v254 = vpop.f32.mrb[0].mxu0
    %v255 = vadd.f32 %v153, %v254
    %v256 = vpop.f32.mrb[0].mxu0
    %v257 = vpop.f32.mrb[0].mxu0
    %v258 = vadd.f32 %v156, %v257
    %v259 = vpop.f32.mrb[0].mxu0
    %260 = vdwg.mxu0
    %v261 = vld [vmem:[%s4] sm:$0xff]
    %v262 = vld [vmem:[%s4 + $0x8] sm:$0xff]
    %v263 = vld [vmem:[%s4 + $0x10] sm:$0xff]
    %v264 = vld [vmem:[%s4 + $0x18] sm:$0xff]
    %v265 = vld [vmem:[%s4 + $0x20] sm:$0xff]
    %v266 = vld [vmem:[%s4 + $0x28] sm:$0xff]
    %v267 = vld [vmem:[%s4 + $0x30] sm:$0xff]
    %v268 = vld [vmem:[%s4 + $0x38] sm:$0xff]
    %270 = vset.pattern.permute.xlu0 0
    %271 = vperm.xlu0 %270, %v261
    %v272 = vpop.permute.xlu0 %271
    %275 = vset.pattern.permute.xlu0 0
    %276 = vperm.xlu0 %275, %v262
    %v277 = vpop.permute.xlu0 %276
    %280 = vset.pattern.permute.xlu0 0
    %281 = vperm.xlu0 %280, %v263
    %v282 = vpop.permute.xlu0 %281
    %285 = vset.pattern.permute.xlu0 0
    %286 = vperm.xlu0 %285, %v264
    %v287 = vpop.permute.xlu0 %286
    %290 = vset.pattern.permute.xlu0 0
    %291 = vperm.xlu0 %290, %v265
    %v292 = vpop.permute.xlu0 %291
    %295 = vset.pattern.permute.xlu0 0
    %296 = vperm.xlu0 %295, %v266
    %v297 = vpop.permute.xlu0 %296
    %300 = vset.pattern.permute.xlu0 0
    %301 = vperm.xlu0 %300, %v267
    %v302 = vpop.permute.xlu0 %301
    %305 = vset.pattern.permute.xlu0 0
    %306 = vperm.xlu0 %305, %v268
    %v307 = vpop.permute.xlu0 %306
    %v309 = vadd.f32 %v231, %v272
    %v310 = vadd.f32 %v234, %v277
    %v311 = vadd.f32 %v239, %v282
    %v312 = vadd.f32 %v242, %v287
    %v313 = vadd.f32 %v247, %v292
    %v314 = vadd.f32 %v250, %v297
    %v315 = vadd.f32 %v255, %v302
    %v316 = vadd.f32 %v258, %v307
    %v317 = vtanh.pop %v309
    %v318 = vtanh.pop %v310
    %v319 = vtanh.pop %v311
    %v320 = vtanh.pop %v312
    %v321 = vtanh.pop %v313
    %v322 = vtanh.pop %v314
    %v323 = vtanh.pop %v315
    %v324 = vtanh.pop %v316
    %v325 = vld [vmem:[%s5] sm:$0xf]
    %v326 = vld [vmem:[%s5 + $0x4] sm:$0xf]
    %v327 = vld [vmem:[%s5 + $0x8] sm:$0xf]
    %v328 = vld [vmem:[%s5 + $0xc] sm:$0xf]
    %v329 = vld [vmem:[%s5 + $0x10] sm:$0xf]
    %v330 = vld [vmem:[%s5 + $0x14] sm:$0xf]
    %v331 = vld [vmem:[%s5 + $0x18] sm:$0xf]
    %v332 = vld [vmem:[%s5 + $0x1c] sm:$0xf]
    %v333 = vpack.c.bf16 %v318, %v317
    %v334 = vpack.c.bf16 %v320, %v319
    %v335 = vpack.c.bf16 %v322, %v321
    %v336 = vpack.c.bf16 %v324, %v323
    %v337 = vld [vmem:[%s6] sm:$0xff]
    %v338 = vld [vmem:[%s6 + $0x8] sm:$0xff]
    %v339 = vld [vmem:[%s6 + $0x10] sm:$0xff]
    %v340 = vld [vmem:[%s6 + $0x18] sm:$0xff]
    %v341 = vld [vmem:[%s6 + $0x20] sm:$0xff]
    %v342 = vld [vmem:[%s6 + $0x28] sm:$0xff]
    %v343 = vld [vmem:[%s6 + $0x30] sm:$0xff]
    %v344 = vld [vmem:[%s6 + $0x38] sm:$0xff]
    %346 = vset.pattern.permute.xlu0 0
    %347 = vperm.xlu0 %346, %v337
    %v348 = vpop.permute.xlu0 %347
    %351 = vset.pattern.permute.xlu0 0
    %352 = vperm.xlu0 %351, %v338
    %v353 = vpop.permute.xlu0 %352
    %356 = vset.pattern.permute.xlu0 0
    %357 = vperm.xlu0 %356, %v339
    %v358 = vpop.permute.xlu0 %357
    %361 = vset.pattern.permute.xlu0 0
    %362 = vperm.xlu0 %361, %v340
    %v363 = vpop.permute.xlu0 %362
    %366 = vset.pattern.permute.xlu0 0
    %367 = vperm.xlu0 %366, %v341
    %v368 = vpop.permute.xlu0 %367
    %371 = vset.pattern.permute.xlu0 0
    %372 = vperm.xlu0 %371, %v342
    %v373 = vpop.permute.xlu0 %372
    %376 = vset.pattern.permute.xlu0 0
    %377 = vperm.xlu0 %376, %v343
    %v378 = vpop.permute.xlu0 %377
    %381 = vset.pattern.permute.xlu0 0
    %382 = vperm.xlu0 %381, %v344
    %v383 = vpop.permute.xlu0 %382
    %v393 = vunpack.c.l.b16 %v325
    %v394 = vunpack.c.l.b16 %v326
    %v395 = vunpack.c.l.b16 %v327
    %v396 = vunpack.c.l.b16 %v328
    %v397 = vunpack.c.l.b16 %v329
    %v398 = vunpack.c.l.b16 %v330
    %v399 = vunpack.c.l.b16 %v331
    %v400 = vunpack.c.l.b16 %v332
    %v401 = vpack.c.b16 %v394, %v393
    %v402 = vpack.c.b16 %v396, %v395
    %v403 = vpack.c.b16 %v398, %v397
    %v404 = vpack.c.b16 %v400, %v399
    %vm405 = vcmask 523264
    %v407 = vsel %vm405, %v401, 0
    %v410 = vsel %vm405, %v402, 0
    %v413 = vsel %vm405, %v403, 0
    %v416 = vsel %vm405, %v404, 0
    %418 = vmatprep.subr.bf16.mxu0 0
    %419 = vmatpush1.bf16.msra.mxu0 %v333
    %420 = vmatprep.subr.bf16.mxu0 0
    %421 = vmatpush1.bf16.msra.mxu0 %v334
    %422 = vmatprep.subr.bf16.mxu0 0
    %423 = vmatpush1.bf16.msra.mxu0 %v335
    %424 = vmatprep.subr.bf16.mxu0 0
    %425 = vmatpush1.bf16.msra.mxu0 %v336
    %426 = vmatprep.subr.bf16.mxu0 0
    %427 = vmatpush1.bf16.msra.mxu0 0
    %428 = vmatprep.subr.bf16.mxu0 0
    %429 = vmatpush1.bf16.msra.mxu0 0
    %430 = vmatprep.subr.bf16.mxu0 0
    %431 = vmatpush1.bf16.msra.mxu0 0
    %432 = vmatprep.subr.bf16.mxu0 0
    %433 = vmatpush1.bf16.msra.mxu0 0
    %434 = vmatprep.subr.bf16.mxu0 0
    %435 = vmatpush1.bf16.msra.mxu0 0
    %436 = vmatprep.subr.bf16.mxu0 0
    %437 = vmatpush1.bf16.msra.mxu0 0
    %438 = vmatprep.subr.bf16.mxu0 0
    %439 = vmatpush1.bf16.msra.mxu0 0
    %440 = vmatprep.subr.bf16.mxu0 0
    %441 = vmatpush1.bf16.msra.mxu0 0
    %442 = vmatprep.subr.bf16.mxu0 0
    %443 = vmatpush1.bf16.msra.mxu0 0
    %444 = vmatprep.subr.bf16.mxu0 0
    %445 = vmatpush1.bf16.msra.mxu0 0
    %446 = vmatprep.subr.bf16.mxu0 0
    %447 = vmatpush1.bf16.msra.mxu0 0
    %448 = vmatprep.subr.bf16.mxu0 0
    %449 = vmatpush1.bf16.msra.mxu0 0
    %450 = vmatprep.mubr.bf16.mxu0 0
    %451 = vmatmul.mubr.bf16.gmra.mrb[0].mxu0 %v407
    %v452 = vpop.f32.mrb[0].mxu0
    %v453 = vadd.f32 %v348, %v452
    %v454 = vpop.f32.mrb[0].mxu0
    %v455 = vpop.f32.mrb[0].mxu0
    %v456 = vadd.f32 %v353, %v455
    %v457 = vpop.f32.mrb[0].mxu0
    %458 = vmatprep.mubr.bf16.mxu0 0
    %459 = vmatmul.mubr.bf16.gmra.mrb[0].mxu0 %v410
    %v460 = vpop.f32.mrb[0].mxu0
    %v461 = vadd.f32 %v358, %v460
    %v462 = vpop.f32.mrb[0].mxu0
    %v463 = vpop.f32.mrb[0].mxu0
    %v464 = vadd.f32 %v363, %v463
    %v465 = vpop.f32.mrb[0].mxu0
    %466 = vmatprep.mubr.bf16.mxu0 0
    %467 = vmatmul.mubr.bf16.gmra.mrb[0].mxu0 %v413
    %v468 = vpop.f32.mrb[0].mxu0
    %v469 = vadd.f32 %v368, %v468
    %v470 = vpop.f32.mrb[0].mxu0
    %v471 = vpop.f32.mrb[0].mxu0
    %v472 = vadd.f32 %v373, %v471
    %v473 = vpop.f32.mrb[0].mxu0
    %474 = vmatprep.mubr.bf16.mxu0 0
    %475 = vmatmul.mubr.bf16.gmra.mrb[0].mxu0 %v416
    %v476 = vpop.f32.mrb[0].mxu0
    %v477 = vadd.f32 %v378, %v476
    %v478 = vpop.f32.mrb[0].mxu0
    %v479 = vpop.f32.mrb[0].mxu0
    %v480 = vadd.f32 %v383, %v479
    %v481 = vpop.f32.mrb[0].mxu0
    %482 = vdwg.mxu0
    %v483 = vtanh.pop %v453
    %v484 = vtanh.pop %v456
    %v485 = vtanh.pop %v461
    %v486 = vtanh.pop %v464
    %v487 = vtanh.pop %v469
    %v488 = vtanh.pop %v472
    %v489 = vtanh.pop %v477
    %v490 = vtanh.pop %v480
    %v491 = vld [vmem:[%s7] sm:$0xf]
    %v492 = vld [vmem:[%s7 + $0x4] sm:$0xf]
    %v493 = vpack.c.bf16 %v484, %v483
    %v494 = vpack.c.bf16 %v486, %v485
    %v495 = vpack.c.bf16 %v488, %v487
    %v496 = vpack.c.bf16 %v490, %v489
    %v497 = vld [vmem:[%s8] sm:$0xff]
    %v498 = vld [vmem:[%s8 + $0x8] sm:$0xff]
    %500 = vset.pattern.permute.xlu0 0
    %501 = vperm.xlu0 %500, %v497
    %v502 = vpop.permute.xlu0 %501
    %505 = vset.pattern.permute.xlu0 0
    %506 = vperm.xlu0 %505, %v498
    %v507 = vpop.permute.xlu0 %506
    %v511 = vunpack.c.l.b16 %v491
    %v512 = vunpack.c.l.b16 %v492
    %v513 = vpack.c.b16 %v512, %v511
    %v515 = vsel %vm405, %v513, 0
    %517 = vmatprep.subr.bf16.mxu0 0
    %518 = vmatpush1.bf16.msra.mxu0 %v493
    %519 = vmatprep.subr.bf16.mxu0 0
    %520 = vmatpush1.bf16.msra.mxu0 %v494
    %521 = vmatprep.subr.bf16.mxu0 0
    %522 = vmatpush1.bf16.msra.mxu0 %v495
    %523 = vmatprep.subr.bf16.mxu0 0
    %524 = vmatpush1.bf16.msra.mxu0 %v496
    %525 = vmatprep.subr.bf16.mxu0 0
    %526 = vmatpush1.bf16.msra.mxu0 0
    %527 = vmatprep.subr.bf16.mxu0 0
    %528 = vmatpush1.bf16.msra.mxu0 0
    %529 = vmatprep.subr.bf16.mxu0 0
    %530 = vmatpush1.bf16.msra.mxu0 0
    %531 = vmatprep.subr.bf16.mxu0 0
    %532 = vmatpush1.bf16.msra.mxu0 0
    %533 = vmatprep.subr.bf16.mxu0 0
    %534 = vmatpush1.bf16.msra.mxu0 0
    %535 = vmatprep.subr.bf16.mxu0 0
    %536 = vmatpush1.bf16.msra.mxu0 0
    %537 = vmatprep.subr.bf16.mxu0 0
    %538 = vmatpush1.bf16.msra.mxu0 0
    %539 = vmatprep.subr.bf16.mxu0 0
    %540 = vmatpush1.bf16.msra.mxu0 0
    %541 = vmatprep.subr.bf16.mxu0 0
    %542 = vmatpush1.bf16.msra.mxu0 0
    %543 = vmatprep.subr.bf16.mxu0 0
    %544 = vmatpush1.bf16.msra.mxu0 0
    %545 = vmatprep.subr.bf16.mxu0 0
    %546 = vmatpush1.bf16.msra.mxu0 0
    %547 = vmatprep.subr.bf16.mxu0 0
    %548 = vmatpush1.bf16.msra.mxu0 0
    %549 = vmatprep.mubr.bf16.mxu0 0
    %550 = vmatmul.mubr.bf16.gmra.mrb[0].mxu0 %v515
    %v551 = vpop.f32.mrb[0].mxu0
    %v552 = vadd.f32 %v502, %v551
    %v553 = vpop.f32.mrb[0].mxu0
    %v554 = vpop.f32.mrb[0].mxu0
    %v555 = vadd.f32 %v507, %v554
    %v556 = vpop.f32.mrb[0].mxu0
    %557 = vdwg.mxu0
    %v558 = vmin.f32 %v552, 30.0
    %v559 = vmul.f32 %v558, 1.442695
    %v560 = vpow.pop %v559
    %vm561 = vcmp.gt.f32.partialorder %v552, 30.0
    %v562 = vadd.f32 %v560, 1.0
    %v563 = vlog2.pop %v562
    %v564 = vmul.f32 %v563, 0.6931472
    %v565 = vmul.f32 -0.5, %v560
    %v566 = vadd.f32 %v565, 1.0
    %v567 = vmul.f32 %v566, %v560
    %v568 = vand.u32 2147483647, %v560
    %vm569 = vcmp.lt.f32.partialorder %v568, 0.0004427343
    %v570 = vsel %vm569, %v567, %v564
    %v571 = vsel %vm561, %v552, %v570
    %v572 = vmul.f32 %v571, %v36
    %v573 = vadd.f32 %v572, %v555
    %vm574 = vcmask 15360
    %575 = vst.msk [vmem:[%s9] sm:$0xff] %vm574, %v573
    %v576 = vlog2.pop %v571
    %v577 = vmul.f32 %v576, 0.6931472
    %v578 = vsel %vm574, %v577, 0.0
    %v579 = vrot.slane %v578, 4
    %v580 = vadd.f32 %v578, %v579
    %v581 = vrot.slane %v580, 2
    %v582 = vadd.f32 %v580, %v581
    %v583 = vrot.slane %v582, 1
    %v584 = vadd.f32 %v582, %v583
    %vm585 = vcmask 8192
    %586 = vst.msk [vmem:[#allocation2] sm:$0x1] %vm585, %v584
    // Predicated region
    $region38: #{conditional_layer_forward.1} parent=1 // pred_check
      _
    $region39: #{conditional_layer_forward.1} parent=1 // pred_check_branch
      %588 = sbr.rel (0) target = $region41
    $region40: #{conditional_layer_forward.1} parent=1 // pred_region
      _
    $region41: #{conditional_layer_forward.1} parent=1 // pred_fallthru
      _
    // Predicated region
    $region42: #{conditional_layer_forward.1} parent=1 // pred_check
      _
    $region43: #{conditional_layer_forward.1} parent=1 // pred_check_branch
      %590 = sbr.rel (0) target = $region45
    $region44: #{conditional_layer_forward.1} parent=1 // pred_region
      %s592 = ssub.s32 16, 16
      %593 = vsyncadd [#allocation3], %s592
      %s595 = sshll.u32 [#allocation2], 4
      %s596 = int_to_ptr.vmem [resolvable:$true] %s595
      %598 = dma.vmem_to_hbm [thread:$0]  %s596, 16, %s10, [#allocation3]
    $region45: #{conditional_layer_forward.1} parent=1 // pred_fallthru
      _
    // Predicated region
    $region46: #{conditional_layer_forward.1} parent=1 // pred_check
      _
    $region47: #{conditional_layer_forward.1} parent=1 // pred_check_branch
      %600 = sbr.rel (0) target = $region49
    $region48: #{conditional_layer_forward.1} parent=1 // pred_region
      _
    $region49: #{conditional_layer_forward.1} parent=1 // pred_fallthru
      _
    // Predicated region
    $region50: #{conditional_layer_forward.1} parent=1 // pred_check
      _
    $region51: #{conditional_layer_forward.1} parent=1 // pred_check_branch
      %602 = sbr.rel (0) target = $region53
    $region52: #{conditional_layer_forward.1} parent=1 // pred_region
      %603 = dma.done [#allocation3], 16
    $region53: #{conditional_layer_forward.1} parent=1 // pred_fallthru
      _
    %604 = vsyncpa [#allocation3], 1

</llo_original>
